<compile_context>
chip_gen: v6e
topology: v6e:2x2x1
jax: 0.10.0
libtpu: 0.0.40
codegen_flags: <defaults>
</compile_context>

<pallas_src>
import jax
import jax.numpy as jnp
from jax.experimental import pallas as pl
from jax.experimental.pallas import tpu as pltpu


def _generator_kernel(x_ref, w1_ref, b1_ref, w2_ref, b2_ref, w23_ref, b23_ref,
                      z_ref, xhat_ref, zhat_ref):
    """Fused 3-layer forward, feature-major layout.

    x_ref   : (D, TM)   input tile, batch on lanes
    w1_ref  : (H, D)    encoder_1 weight (PyTorch (out, in))
    w2_ref  : (D, H)    decoder_1 weight
    w23_ref : (H, H)    fused W3 @ W2
    b*_ref  : (out, 1)  biases, broadcast across batch lanes
    outputs : (H, TM), (D, TM), (H, TM)
    """
    x = x_ref[...]

    # encoder_1: z = tanh(W1 @ x + b1)
    z = jnp.tanh(
        jnp.dot(w1_ref[...], x, preferred_element_type=jnp.float32)
        + b1_ref[...]
    )
    z_ref[...] = z.astype(z_ref.dtype)

    # decoder_1: X_hat = W2 @ z + b2   (depends only on z)
    x_hat = (
        jnp.dot(w2_ref[...], z, preferred_element_type=jnp.float32)
        + b2_ref[...]
    )
    xhat_ref[...] = x_hat.astype(xhat_ref.dtype)

    # encoder_2 fused with decoder_1: z_hat = tanh(W23 @ z + b23)
    #   == tanh(W3 @ (W2 @ z + b2) + b3)   (depends only on z -> overlaps above)
    z_hat = jnp.tanh(
        jnp.dot(w23_ref[...], z, preferred_element_type=jnp.float32)
        + b23_ref[...]
    )
    zhat_ref[...] = z_hat.astype(zhat_ref.dtype)


def generator_forward(x, params, *, tm=512):
    """x: [B, D] float32. params: dict of (W, b) per layer in PyTorch Linear
    convention W: (out, in), b: (out,). Returns (z, X_hat, z_hat)."""
    B, D = x.shape
    H = D // 2
    assert D % 16 == 0, "feature dims must be multiples of 8 for TPU tiling"
    assert tm % 128 == 0, "batch tile must be lane-aligned"

    w1, b1 = params["enc1"]   # (H, D), (H,)
    w2, b2 = params["dec1"]   # (D, H), (D,)
    w3, b3 = params["enc2"]   # (H, D), (H,)

    # Fuse decoder_1 -> encoder_2 so z_hat depends only on z.
    w23 = w3 @ w2             # (H, H)
    b23 = w3 @ b2 + b3        # (H,)

    # Feature-major layout: batch on the lane axis, padded to the tile size.
    x_t = x.T                                       # (D, B)
    b_pad = ((max(B, 1) + 127) // 128) * 128        # lane alignment
    TM = min(tm, b_pad)
    b_pad = ((b_pad + TM - 1) // TM) * TM           # multiple of the tile
    if b_pad != B:
        x_t = jnp.pad(x_t, ((0, 0), (0, b_pad - B)))

    grid = (b_pad // TM,)

    def batch_spec(rows):
        return pl.BlockSpec((rows, TM), lambda i: (0, i))

    def const_spec(shape):
        return pl.BlockSpec(shape, lambda i: (0, 0))

    cost = pl.CostEstimate(
        flops=2 * b_pad * (D * H + H * D + H * H),
        transcendentals=2 * b_pad * H,
        bytes_accessed=4 * (b_pad * (D + H + D + H)
                            + 2 * D * H + H * H + 2 * H + D),
    )

    z_t, xhat_t, zhat_t = pl.pallas_call(
        _generator_kernel,
        out_shape=(
            jax.ShapeDtypeStruct((H, b_pad), x.dtype),   # z^T
            jax.ShapeDtypeStruct((D, b_pad), x.dtype),   # X_hat^T
            jax.ShapeDtypeStruct((H, b_pad), x.dtype),   # z_hat^T
        ),
        grid=grid,
        in_specs=[
            batch_spec(D),                              # x^T tile
            const_spec((H, D)), const_spec((H, 1)),     # W1, b1
            const_spec((D, H)), const_spec((D, 1)),     # W2, b2
            const_spec((H, H)), const_spec((H, 1)),     # W23, b23
        ],
        out_specs=(
            batch_spec(H),
            batch_spec(D),
            batch_spec(H),
        ),
        compiler_params=pltpu.CompilerParams(
            dimension_semantics=("parallel",)),
        cost_estimate=cost,
    )(x_t, w1, b1.reshape(H, 1), w2, b2.reshape(D, 1), w23, b23.reshape(H, 1))

    # Back to the module's [batch, features] convention, dropping padding.
    z = z_t[:, :B].T
    x_hat = xhat_t[:, :B].T
    z_hat = zhat_t[:, :B].T
    return z, x_hat, z_hat


def _init_linear(key, out_features, in_features):
    """Deterministic init mimicking torch.nn.Linear default U(-1/sqrt(fan_in))."""
    kw, kb = jax.random.split(key)
    bound = 1.0 / jnp.sqrt(jnp.float32(in_features))
    w = jax.random.uniform(kw, (out_features, in_features), jnp.float32,
                           -bound, bound)
    b = jax.random.uniform(kb, (out_features,), jnp.float32, -bound, bound)
    return w, b


def _reference_forward(x, params):
    w1, b1 = params["enc1"]
    w2, b2 = params["dec1"]
    w3, b3 = params["enc2"]
    z = jnp.tanh(x @ w1.T + b1)
    x_hat = z @ w2.T + b2
    z_hat = jnp.tanh(x_hat @ w3.T + b3)
    return z, x_hat, z_hat


if __name__ == "__main__":
    # Small shapes consistent with the module: input_size=32 -> hidden=16.
    batch, input_size = 8, 32
    hidden_size = input_size // 2

    key = jax.random.PRNGKey(0)
    k_x, k1, k2, k3 = jax.random.split(key, 4)

    x = jax.random.normal(k_x, (batch, input_size), jnp.float32)
    params = {
        "enc1": _init_linear(k1, hidden_size, input_size),
        "dec1": _init_linear(k2, input_size, hidden_size),
        "enc2": _init_linear(k3, hidden_size, input_size),
    }

    fwd = jax.jit(generator_forward)
    z, x_hat, z_hat = jax.block_until_ready(fwd(x, params))

    # Sanity-check against a pure-JAX reference.
    z_r, x_hat_r, z_hat_r = _reference_forward(x, params)
    assert z.shape == (batch, hidden_size)
    assert x_hat.shape == (batch, input_size)
    assert z_hat.shape == (batch, hidden_size)
    assert jnp.allclose(z, z_r, atol=1e-5)
    assert jnp.allclose(x_hat, x_hat_r, atol=1e-5)
    # z_hat uses the fused W3@W2 path (identical modulo f32 rounding).
    assert jnp.allclose(z_hat, z_hat_r, atol=1e-4)

    print("KERNEL_OK")
</pallas_src>

<mosaic_0001>
module attributes {stable_mosaic.version = 11 : i64} {
  func.func @_generator_kernel(%arg0: i32, %arg1: memref<32x128xf32, #tpu.memory_space<vmem>>, %arg2: memref<16x32xf32, #tpu.memory_space<vmem>>, %arg3: memref<16x1xf32, #tpu.memory_space<vmem>>, %arg4: memref<32x16xf32, #tpu.memory_space<vmem>>, %arg5: memref<32x1xf32, #tpu.memory_space<vmem>>, %arg6: memref<16x16xf32, #tpu.memory_space<vmem>>, %arg7: memref<16x1xf32, #tpu.memory_space<vmem>>, %arg8: memref<16x128xf32, #tpu.memory_space<vmem>>, %arg9: memref<32x128xf32, #tpu.memory_space<vmem>>, %arg10: memref<16x128xf32, #tpu.memory_space<vmem>>) attributes {dimension_semantics = [#tpu.dimension_semantics<parallel>], iteration_bounds = array<i64: 1>, scalar_prefetch = 0 : i64, scratch_operands = 0 : i64, tpu.core_type = #tpu.core_type<tc>, window_params = [{transform_indices = @transform_0, window_bounds = array<i64: 32, 128>}, {pipeline_mode = #tpu.pipeline_mode<synchronous>, transform_indices = @transform_1, window_bounds = array<i64: 16, 32>}, {pipeline_mode = #tpu.pipeline_mode<synchronous>, transform_indices = @transform_2, window_bounds = array<i64: 16, 1>}, {pipeline_mode = #tpu.pipeline_mode<synchronous>, transform_indices = @transform_3, window_bounds = array<i64: 32, 16>}, {pipeline_mode = #tpu.pipeline_mode<synchronous>, transform_indices = @transform_4, window_bounds = array<i64: 32, 1>}, {pipeline_mode = #tpu.pipeline_mode<synchronous>, transform_indices = @transform_5, window_bounds = array<i64: 16, 16>}, {pipeline_mode = #tpu.pipeline_mode<synchronous>, transform_indices = @transform_6, window_bounds = array<i64: 16, 1>}, {transform_indices = @transform_7, window_bounds = array<i64: 16, 128>}, {transform_indices = @transform_8, window_bounds = array<i64: 32, 128>}, {transform_indices = @transform_9, window_bounds = array<i64: 16, 128>}]} {
    %c0 = arith.constant 0 : index
    %c0_0 = arith.constant 0 : index
    %0 = vector.load %arg1[%c0, %c0_0] : memref<32x128xf32, #tpu.memory_space<vmem>>, vector<32x128xf32>
    %c0_1 = arith.constant 0 : index
    %c0_2 = arith.constant 0 : index
    %1 = vector.load %arg2[%c0_1, %c0_2] : memref<16x32xf32, #tpu.memory_space<vmem>>, vector<16x32xf32>
    %cst = arith.constant dense<0.000000e+00> : vector<16x128xf32>
    %2 = tpu.matmul %1, %0, %cst {dimension_numbers = #tpu.dot_dimension_numbers<[1], [0], [0], [1], [0, 0, 1, 1], [], []>} : vector<16x32xf32>, vector<32x128xf32>, vector<16x128xf32> -> vector<16x128xf32>
    %c0_3 = arith.constant 0 : index
    %c0_4 = arith.constant 0 : index
    %3 = vector.load %arg3[%c0_3, %c0_4] : memref<16x1xf32, #tpu.memory_space<vmem>>, vector<16x1xf32>
    %4 = vector.broadcast %3 : vector<16x1xf32> to vector<16x128xf32>
    %5 = arith.addf %2, %4 : vector<16x128xf32>
    %6 = math.tanh %5 : vector<16x128xf32>
    %c0_5 = arith.constant 0 : index
    %c0_6 = arith.constant 0 : index
    %7 = vector.load %arg8[%c0_5, %c0_6] : memref<16x128xf32, #tpu.memory_space<vmem>>, vector<16x128xf32>
    tpu.vector_store %arg8[%c0_5, %c0_6], %6 {strides = array<i32>} : memref<16x128xf32, #tpu.memory_space<vmem>>, vector<16x128xf32>,
    %c0_7 = arith.constant 0 : index
    %c0_8 = arith.constant 0 : index
    %8 = vector.load %arg4[%c0_7, %c0_8] : memref<32x16xf32, #tpu.memory_space<vmem>>, vector<32x16xf32>
    %cst_9 = arith.constant dense<0.000000e+00> : vector<32x128xf32>
    %9 = tpu.matmul %8, %6, %cst_9 {dimension_numbers = #tpu.dot_dimension_numbers<[1], [0], [0], [1], [0, 0, 1, 1], [], []>} : vector<32x16xf32>, vector<16x128xf32>, vector<32x128xf32> -> vector<32x128xf32>
    %c0_10 = arith.constant 0 : index
    %c0_11 = arith.constant 0 : index
    %10 = vector.load %arg5[%c0_10, %c0_11] : memref<32x1xf32, #tpu.memory_space<vmem>>, vector<32x1xf32>
    %11 = vector.broadcast %10 : vector<32x1xf32> to vector<32x128xf32>
    %12 = arith.addf %9, %11 : vector<32x128xf32>
    %c0_12 = arith.constant 0 : index
    %c0_13 = arith.constant 0 : index
    %13 = vector.load %arg9[%c0_12, %c0_13] : memref<32x128xf32, #tpu.memory_space<vmem>>, vector<32x128xf32>
    tpu.vector_store %arg9[%c0_12, %c0_13], %12 {strides = array<i32>} : memref<32x128xf32, #tpu.memory_space<vmem>>, vector<32x128xf32>,
    %c0_14 = arith.constant 0 : index
    %c0_15 = arith.constant 0 : index
    %14 = vector.load %arg6[%c0_14, %c0_15] : memref<16x16xf32, #tpu.memory_space<vmem>>, vector<16x16xf32>
    %cst_16 = arith.constant dense<0.000000e+00> : vector<16x128xf32>
    %15 = tpu.matmul %14, %6, %cst_16 {dimension_numbers = #tpu.dot_dimension_numbers<[1], [0], [0], [1], [0, 0, 1, 1], [], []>} : vector<16x16xf32>, vector<16x128xf32>, vector<16x128xf32> -> vector<16x128xf32>
    %c0_17 = arith.constant 0 : index
    %c0_18 = arith.constant 0 : index
    %16 = vector.load %arg7[%c0_17, %c0_18] : memref<16x1xf32, #tpu.memory_space<vmem>>, vector<16x1xf32>
    %17 = vector.broadcast %16 : vector<16x1xf32> to vector<16x128xf32>
    %18 = arith.addf %15, %17 : vector<16x128xf32>
    %19 = math.tanh %18 : vector<16x128xf32>
    %c0_19 = arith.constant 0 : index
    %c0_20 = arith.constant 0 : index
    %20 = vector.load %arg10[%c0_19, %c0_20] : memref<16x128xf32, #tpu.memory_space<vmem>>, vector<16x128xf32>
    tpu.vector_store %arg10[%c0_19, %c0_20], %19 {strides = array<i32>} : memref<16x128xf32, #tpu.memory_space<vmem>>, vector<16x128xf32>,
    return
  }
  func.func @transform_0(%arg0: i32) -> (i32, i32) {
    %c0_i32 = arith.constant 0 : i32
    %c0_i32_0 = arith.constant 0 : i32
    return %c0_i32, %arg0 : i32, i32
  }
  func.func @transform_1(%arg0: i32) -> (i32, i32) {
    %c0_i32 = arith.constant 0 : i32
    %c0_i32_0 = arith.constant 0 : i32
    %c0_i32_1 = arith.constant 0 : i32
    return %c0_i32, %c0_i32_0 : i32, i32
  }
  func.func @transform_2(%arg0: i32) -> (i32, i32) {
    %c0_i32 = arith.constant 0 : i32
    %c0_i32_0 = arith.constant 0 : i32
    %c0_i32_1 = arith.constant 0 : i32
    return %c0_i32, %c0_i32_0 : i32, i32
  }
  func.func @transform_3(%arg0: i32) -> (i32, i32) {
    %c0_i32 = arith.constant 0 : i32
    %c0_i32_0 = arith.constant 0 : i32
    %c0_i32_1 = arith.constant 0 : i32
    return %c0_i32, %c0_i32_0 : i32, i32
  }
  func.func @transform_4(%arg0: i32) -> (i32, i32) {
    %c0_i32 = arith.constant 0 : i32
    %c0_i32_0 = arith.constant 0 : i32
    %c0_i32_1 = arith.constant 0 : i32
    return %c0_i32, %c0_i32_0 : i32, i32
  }
  func.func @transform_5(%arg0: i32) -> (i32, i32) {
    %c0_i32 = arith.constant 0 : i32
    %c0_i32_0 = arith.constant 0 : i32
    %c0_i32_1 = arith.constant 0 : i32
    return %c0_i32, %c0_i32_0 : i32, i32
  }
  func.func @transform_6(%arg0: i32) -> (i32, i32) {
    %c0_i32 = arith.constant 0 : i32
    %c0_i32_0 = arith.constant 0 : i32
    %c0_i32_1 = arith.constant 0 : i32
    return %c0_i32, %c0_i32_0 : i32, i32
  }
  func.func @transform_7(%arg0: i32) -> (i32, i32) {
    %c0_i32 = arith.constant 0 : i32
    %c0_i32_0 = arith.constant 0 : i32
    return %c0_i32, %arg0 : i32, i32
  }
  func.func @transform_8(%arg0: i32) -> (i32, i32) {
    %c0_i32 = arith.constant 0 : i32
    %c0_i32_0 = arith.constant 0 : i32
    return %c0_i32, %arg0 : i32, i32
  }
  func.func @transform_9(%arg0: i32) -> (i32, i32) {
    %c0_i32 = arith.constant 0 : i32
    %c0_i32_0 = arith.constant 0 : i32
    return %c0_i32, %arg0 : i32, i32
  }
}

</mosaic_0001>

<llo_original>
// kernel: generator_forward.1
$region0: #{generator_forward.1}
  #allocation0 [shape = 'u32[]', space=smem, size = 0x4, offset = 0x4, fixed_abs, tag = 'smem constant byte address 0x4 - core index']
  #allocation1 [shape = 'u32[144,128]{1,0:T(1,128)}', space=vmem, size = 0x12000, scoped, tag = 'internal scratch']
  %s0 = inlined_call_operand.vmem [shape: f32[32,128], index: 0, kind: input, shape index: {}]
  %s1 = inlined_call_operand.vmem [shape: f32[16,32], index: 1, kind: input, shape index: {}]
  %s2 = inlined_call_operand.vmem [shape: f32[16,1], index: 2, kind: input, shape index: {}]
  %s3 = inlined_call_operand.vmem [shape: f32[32,16], index: 3, kind: input, shape index: {}]
  %s4 = inlined_call_operand.vmem [shape: f32[32,1], index: 4, kind: input, shape index: {}]
  %s5 = inlined_call_operand.vmem [shape: f32[16,16], index: 5, kind: input, shape index: {}]
  %s6 = inlined_call_operand.vmem [shape: f32[16,1], index: 6, kind: input, shape index: {}]
  %s7 = inlined_call_operand.vmem [shape: f32[16,128], index: 7, kind: output, shape index: {0}]
  %s8 = inlined_call_operand.vmem [shape: f32[32,128], index: 8, kind: output, shape index: {1}]
  %s9 = inlined_call_operand.vmem [shape: f32[16,128], index: 9, kind: output, shape index: {2}]
  %10 = xla_tuple %s7, %s8, %s9
  %s11 = sld [smem:[#allocation0]]
  $region54: #{generator_forward.1} parent=0
    _
  %s13 = ssub.s32 1, %s11
  %s14 = scalar_select 0, %s13, %s11
  // Predicated region
  $region2: #{generator_forward.1} parent=0 // pred_check
    _
  $region3: #{generator_forward.1} parent=0 // pred_check_branch
    %16 = sbr.rel (0) target = $region5
  $region4: #{generator_forward.1} parent=0 // pred_region
    _
  $region5: #{generator_forward.1} parent=0 // pred_fallthru
    _
  // Predicated region
  $region6: #{generator_forward.1} parent=0 // pred_check
    _
  $region7: #{generator_forward.1} parent=0 // pred_check_branch
    %18 = sbr.rel (0) target = $region9
  $region8: #{generator_forward.1} parent=0 // pred_region
    _
  $region9: #{generator_forward.1} parent=0 // pred_fallthru
    _
  // Predicated region
  $region10: #{generator_forward.1} parent=0 // pred_check
    _
  $region11: #{generator_forward.1} parent=0 // pred_check_branch
    %20 = sbr.rel (0) target = $region13
  $region12: #{generator_forward.1} parent=0 // pred_region
    _
  $region13: #{generator_forward.1} parent=0 // pred_fallthru
    _
  // Predicated region
  $region14: #{generator_forward.1} parent=0 // pred_check
    _
  $region15: #{generator_forward.1} parent=0 // pred_check_branch
    %22 = sbr.rel (0) target = $region17
  $region16: #{generator_forward.1} parent=0 // pred_region
    _
  $region17: #{generator_forward.1} parent=0 // pred_fallthru
    _
  // Predicated region
  $region18: #{generator_forward.1} parent=0 // pred_check
    _
  $region19: #{generator_forward.1} parent=0 // pred_check_branch
    %24 = sbr.rel (0) target = $region21
  $region20: #{generator_forward.1} parent=0 // pred_region
    _
  $region21: #{generator_forward.1} parent=0 // pred_fallthru
    _
  // Predicated region
  $region22: #{generator_forward.1} parent=0 // pred_check
    _
  $region23: #{generator_forward.1} parent=0 // pred_check_branch
    %26 = sbr.rel (0) target = $region25
  $region24: #{generator_forward.1} parent=0 // pred_region
    _
  $region25: #{generator_forward.1} parent=0 // pred_fallthru
    _
  // Predicated region
  $region26: #{generator_forward.1} parent=0 // pred_check
    _
  $region27: #{generator_forward.1} parent=0 // pred_check_branch
    %28 = sbr.rel (0) target = $region29
  $region28: #{generator_forward.1} parent=0 // pred_region
    _
  $region29: #{generator_forward.1} parent=0 // pred_fallthru
    _
  %v29 = vld [vmem:[%s0] sm:$0xff]
  %v30 = vld [vmem:[%s0 + $0x8] sm:$0xff]
  %v31 = vld [vmem:[%s0 + $0x10] sm:$0xff]
  %v32 = vld [vmem:[%s0 + $0x18] sm:$0xff]
  %v33 = vld [vmem:[%s1] sm:$0xff]
  %v34 = vld [vmem:[%s1 + $0x8] sm:$0xff]
  %v35 = vld [vmem:[%s2] sm:$0xff]
  %v36 = vld [vmem:[%s2 + $0x8] sm:$0xff]
  %38 = vset.pattern.permute.xlu0 0
  %39 = vperm.xlu0 %38, %v35
  %v40 = vpop.permute.xlu0 %39
  %43 = vset.pattern.permute.xlu0 0
  %44 = vperm.xlu0 %43, %v36
  %v45 = vpop.permute.xlu0 %44
  %vm47 = vcmask 261120
  %v49 = vsel %vm47, %v33, 0
  %v52 = vsel %vm47, %v34, 0
  %54 = vmatprep.subr.mxu0 0.0
  %55 = vmatpush1.msra.mxu0 0.0
  %56 = vmatprep.subr.mxu0 0.0
  %57 = vmatpush1.msra.mxu0 0.0
  %58 = vmatprep.subr.mxu0 0.0
  %59 = vmatpush1.msra.mxu0 0.0
  %60 = vmatprep.subr.mxu0 0.0
  %61 = vmatpush1.msra.mxu0 0.0
  %62 = vmatprep.subr.mxu0 0.0
  %63 = vmatpush1.msra.mxu0 0.0
  %64 = vmatprep.subr.mxu0 0.0
  %65 = vmatpush1.msra.mxu0 0.0
  %66 = vmatprep.subr.mxu0 0.0
  %67 = vmatpush1.msra.mxu0 0.0
  %68 = vmatprep.subr.mxu0 0.0
  %69 = vmatpush1.msra.mxu0 0.0
  %70 = vmatprep.subr.mxu0 0.0
  %71 = vmatpush1.msra.mxu0 0.0
  %72 = vmatprep.subr.mxu0 0.0
  %73 = vmatpush1.msra.mxu0 0.0
  %74 = vmatprep.subr.mxu0 0.0
  %75 = vmatpush1.msra.mxu0 0.0
  %76 = vmatprep.subr.mxu0 0.0
  %77 = vmatpush1.msra.mxu0 0.0
  %78 = vmatprep.subr.mxu0 0.0
  %79 = vmatpush1.msra.mxu0 %v32
  %80 = vmatprep.subr.mxu0 0.0
  %81 = vmatpush1.msra.mxu0 %v31
  %82 = vmatprep.subr.mxu0 0.0
  %83 = vmatpush1.msra.mxu0 %v30
  %84 = vmatprep.subr.mxu0 0.0
  %85 = vmatpush1.msra.mxu0 %v29
  %86 = vmatprep.subr.mxu0 0.0
  %87 = vmatpush2.msra.mxu0 0.0
  %88 = vmatprep.subr.mxu0 0.0
  %89 = vmatpush2.msra.mxu0 0.0
  %90 = vmatprep.subr.mxu0 0.0
  %91 = vmatpush2.msra.mxu0 0.0
  %92 = vmatprep.subr.mxu0 0.0
  %93 = vmatpush2.msra.mxu0 0.0
  %94 = vmatprep.subr.mxu0 0.0
  %95 = vmatpush2.msra.mxu0 0.0
  %96 = vmatprep.subr.mxu0 0.0
  %97 = vmatpush2.msra.mxu0 0.0
  %98 = vmatprep.subr.mxu0 0.0
  %99 = vmatpush2.msra.mxu0 0.0
  %100 = vmatprep.subr.mxu0 0.0
  %101 = vmatpush2.msra.mxu0 0.0
  %102 = vmatprep.subr.mxu0 0.0
  %103 = vmatpush2.msra.mxu0 0.0
  %104 = vmatprep.subr.mxu0 0.0
  %105 = vmatpush2.msra.mxu0 0.0
  %106 = vmatprep.subr.mxu0 0.0
  %107 = vmatpush2.msra.mxu0 0.0
  %108 = vmatprep.subr.mxu0 0.0
  %109 = vmatpush2.msra.mxu0 0.0
  %110 = vmatprep.subr.mxu0 0.0
  %111 = vmatpush2.msra.mxu0 0.0
  %112 = vmatprep.subr.mxu0 0.0
  %113 = vmatpush2.msra.mxu0 0.0
  %114 = vmatprep.subr.mxu0 0.0
  %115 = vmatpush2.msra.mxu0 0.0
  %116 = vmatprep.subr.mxu0 0.0
  %117 = vmatpush2.msra.mxu0 0.0
  %118 = vmatprep.mubr.f32.mxu0 0.0
  %119 = vmatmul.mubr.f32.gmra.mxu0 %v49
  %v120 = vpop.f32.mrf.mxu0
  %v121 = vadd.f32 %v40, %v120
  %v122 = vpop.f32.mrf.mxu0
  %123 = vmatprep.mubr.f32.mxu0 0.0
  %124 = vmatmul.mubr.f32.gmra.mxu0 %v52
  %v125 = vpop.f32.mrf.mxu0
  %v126 = vadd.f32 %v45, %v125
  %v127 = vpop.f32.mrf.mxu0
  %128 = vdwg.mxu0
  %v129 = vtanh.pop %v121
  %v130 = vtanh.pop %v126
  %131 = vst [vmem:[%s7] sm:$0xff] %v129
  %132 = vst [vmem:[%s7 + $0x8] sm:$0xff] %v130
  %v133 = vld [vmem:[%s3] sm:$0xff]
  %v134 = vld [vmem:[%s3 + $0x8] sm:$0xff]
  %v135 = vld [vmem:[%s3 + $0x10] sm:$0xff]
  %v136 = vld [vmem:[%s3 + $0x18] sm:$0xff]
  %v137 = vld [vmem:[%s4] sm:$0xff]
  %v138 = vld [vmem:[%s4 + $0x8] sm:$0xff]
  %v139 = vld [vmem:[%s4 + $0x10] sm:$0xff]
  %v140 = vld [vmem:[%s4 + $0x18] sm:$0xff]
  %142 = vset.pattern.permute.xlu0 0
  %143 = vperm.xlu0 %142, %v137
  %v144 = vpop.permute.xlu0 %143
  %147 = vset.pattern.permute.xlu0 0
  %148 = vperm.xlu0 %147, %v138
  %v149 = vpop.permute.xlu0 %148
  %152 = vset.pattern.permute.xlu0 0
  %153 = vperm.xlu0 %152, %v139
  %v154 = vpop.permute.xlu0 %153
  %157 = vset.pattern.permute.xlu0 0
  %158 = vperm.xlu0 %157, %v140
  %v159 = vpop.permute.xlu0 %158
  %vm161 = vcmask 130048
  %v163 = vsel %vm161, %v133, 0
  %v166 = vsel %vm161, %v134, 0
  %v169 = vsel %vm161, %v135, 0
  %v172 = vsel %vm161, %v136, 0
  %174 = vmatprep.subr.mxu0 0.0
  %175 = vmatpush1.msra.mxu0 0.0
  %176 = vmatprep.subr.mxu0 0.0
  %177 = vmatpush1.msra.mxu0 0.0
  %178 = vmatprep.subr.mxu0 0.0
  %179 = vmatpush1.msra.mxu0 0.0
  %180 = vmatprep.subr.mxu0 0.0
  %181 = vmatpush1.msra.mxu0 0.0
  %182 = vmatprep.subr.mxu0 0.0
  %183 = vmatpush1.msra.mxu0 0.0
  %184 = vmatprep.subr.mxu0 0.0
  %185 = vmatpush1.msra.mxu0 0.0
  %186 = vmatprep.subr.mxu0 0.0
  %187 = vmatpush1.msra.mxu0 0.0
  %188 = vmatprep.subr.mxu0 0.0
  %189 = vmatpush1.msra.mxu0 0.0
  %190 = vmatprep.subr.mxu0 0.0
  %191 = vmatpush1.msra.mxu0 0.0
  %192 = vmatprep.subr.mxu0 0.0
  %193 = vmatpush1.msra.mxu0 0.0
  %194 = vmatprep.subr.mxu0 0.0
  %195 = vmatpush1.msra.mxu0 0.0
  %196 = vmatprep.subr.mxu0 0.0
  %197 = vmatpush1.msra.mxu0 0.0
  %198 = vmatprep.subr.mxu0 0.0
  %199 = vmatpush1.msra.mxu0 0.0
  %200 = vmatprep.subr.mxu0 0.0
  %201 = vmatpush1.msra.mxu0 0.0
  %202 = vmatprep.subr.mxu0 0.0
  %203 = vmatpush1.msra.mxu0 %v130
  %204 = vmatprep.subr.mxu0 0.0
  %205 = vmatpush1.msra.mxu0 %v129
  %206 = vmatprep.subr.mxu0 0.0
  %207 = vmatpush2.msra.mxu0 0.0
  %208 = vmatprep.subr.mxu0 0.0
  %209 = vmatpush2.msra.mxu0 0.0
  %210 = vmatprep.subr.mxu0 0.0
  %211 = vmatpush2.msra.mxu0 0.0
  %212 = vmatprep.subr.mxu0 0.0
  %213 = vmatpush2.msra.mxu0 0.0
  %214 = vmatprep.subr.mxu0 0.0
  %215 = vmatpush2.msra.mxu0 0.0
  %216 = vmatprep.subr.mxu0 0.0
  %217 = vmatpush2.msra.mxu0 0.0
  %218 = vmatprep.subr.mxu0 0.0
  %219 = vmatpush2.msra.mxu0 0.0
  %220 = vmatprep.subr.mxu0 0.0
  %221 = vmatpush2.msra.mxu0 0.0
  %222 = vmatprep.subr.mxu0 0.0
  %223 = vmatpush2.msra.mxu0 0.0
  %224 = vmatprep.subr.mxu0 0.0
  %225 = vmatpush2.msra.mxu0 0.0
  %226 = vmatprep.subr.mxu0 0.0
  %227 = vmatpush2.msra.mxu0 0.0
  %228 = vmatprep.subr.mxu0 0.0
  %229 = vmatpush2.msra.mxu0 0.0
  %230 = vmatprep.subr.mxu0 0.0
  %231 = vmatpush2.msra.mxu0 0.0
  %232 = vmatprep.subr.mxu0 0.0
  %233 = vmatpush2.msra.mxu0 0.0
  %234 = vmatprep.subr.mxu0 0.0
  %235 = vmatpush2.msra.mxu0 0.0
  %236 = vmatprep.subr.mxu0 0.0
  %237 = vmatpush2.msra.mxu0 0.0
  %238 = vmatprep.mubr.f32.mxu0 0.0
  %239 = vmatmul.mubr.f32.gmra.mxu0 %v163
  %v240 = vpop.f32.mrf.mxu0
  %v241 = vadd.f32 %v144, %v240
  %v242 = vpop.f32.mrf.mxu0
  %243 = vmatprep.mubr.f32.mxu0 0.0
  %244 = vmatmul.mubr.f32.gmra.mxu0 %v166
  %v245 = vpop.f32.mrf.mxu0
  %v246 = vadd.f32 %v149, %v245
  %v247 = vpop.f32.mrf.mxu0
  %248 = vmatprep.mubr.f32.mxu0 0.0
  %249 = vmatmul.mubr.f32.gmra.mxu0 %v169
  %v250 = vpop.f32.mrf.mxu0
  %v251 = vadd.f32 %v154, %v250
  %v252 = vpop.f32.mrf.mxu0
  %253 = vmatprep.mubr.f32.mxu0 0.0
  %254 = vmatmul.mubr.f32.gmra.mxu0 %v172
  %v255 = vpop.f32.mrf.mxu0
  %v256 = vadd.f32 %v159, %v255
  %v257 = vpop.f32.mrf.mxu0
  %258 = vdwg.mxu0
  %259 = vst [vmem:[%s8] sm:$0xff] %v241
  %260 = vst [vmem:[%s8 + $0x8] sm:$0xff] %v246
  %261 = vst [vmem:[%s8 + $0x10] sm:$0xff] %v251
  %262 = vst [vmem:[%s8 + $0x18] sm:$0xff] %v256
  %v263 = vld [vmem:[%s5] sm:$0xff]
  %v264 = vld [vmem:[%s5 + $0x8] sm:$0xff]
  %v265 = vld [vmem:[%s6] sm:$0xff]
  %v266 = vld [vmem:[%s6 + $0x8] sm:$0xff]
  %268 = vset.pattern.permute.xlu0 0
  %269 = vperm.xlu0 %268, %v265
  %v270 = vpop.permute.xlu0 %269
  %273 = vset.pattern.permute.xlu0 0
  %274 = vperm.xlu0 %273, %v266
  %v275 = vpop.permute.xlu0 %274
  %v278 = vsel %vm161, %v263, 0
  %v281 = vsel %vm161, %v264, 0
  %283 = vmatprep.subr.mxu0 0.0
  %284 = vmatpush1.msra.mxu0 0.0
  %285 = vmatprep.subr.mxu0 0.0
  %286 = vmatpush1.msra.mxu0 0.0
  %287 = vmatprep.subr.mxu0 0.0
  %288 = vmatpush1.msra.mxu0 0.0
  %289 = vmatprep.subr.mxu0 0.0
  %290 = vmatpush1.msra.mxu0 0.0
  %291 = vmatprep.subr.mxu0 0.0
  %292 = vmatpush1.msra.mxu0 0.0
  %293 = vmatprep.subr.mxu0 0.0
  %294 = vmatpush1.msra.mxu0 0.0
  %295 = vmatprep.subr.mxu0 0.0
  %296 = vmatpush1.msra.mxu0 0.0
  %297 = vmatprep.subr.mxu0 0.0
  %298 = vmatpush1.msra.mxu0 0.0
  %299 = vmatprep.subr.mxu0 0.0
  %300 = vmatpush1.msra.mxu0 0.0
  %301 = vmatprep.subr.mxu0 0.0
  %302 = vmatpush1.msra.mxu0 0.0
  %303 = vmatprep.subr.mxu0 0.0
  %304 = vmatpush1.msra.mxu0 0.0
  %305 = vmatprep.subr.mxu0 0.0
  %306 = vmatpush1.msra.mxu0 0.0
  %307 = vmatprep.subr.mxu0 0.0
  %308 = vmatpush1.msra.mxu0 0.0
  %309 = vmatprep.subr.mxu0 0.0
  %310 = vmatpush1.msra.mxu0 0.0
  %311 = vmatprep.subr.mxu0 0.0
  %312 = vmatpush1.msra.mxu0 %v130
  %313 = vmatprep.subr.mxu0 0.0
  %314 = vmatpush1.msra.mxu0 %v129
  %315 = vmatprep.subr.mxu0 0.0
  %316 = vmatpush2.msra.mxu0 0.0
  %317 = vmatprep.subr.mxu0 0.0
  %318 = vmatpush2.msra.mxu0 0.0
  %319 = vmatprep.subr.mxu0 0.0
  %320 = vmatpush2.msra.mxu0 0.0
  %321 = vmatprep.subr.mxu0 0.0
  %322 = vmatpush2.msra.mxu0 0.0
  %323 = vmatprep.subr.mxu0 0.0
  %324 = vmatpush2.msra.mxu0 0.0
  %325 = vmatprep.subr.mxu0 0.0
  %326 = vmatpush2.msra.mxu0 0.0
  %327 = vmatprep.subr.mxu0 0.0
  %328 = vmatpush2.msra.mxu0 0.0
  %329 = vmatprep.subr.mxu0 0.0
  %330 = vmatpush2.msra.mxu0 0.0
  %331 = vmatprep.subr.mxu0 0.0
  %332 = vmatpush2.msra.mxu0 0.0
  %333 = vmatprep.subr.mxu0 0.0
  %334 = vmatpush2.msra.mxu0 0.0
  %335 = vmatprep.subr.mxu0 0.0
  %336 = vmatpush2.msra.mxu0 0.0
  %337 = vmatprep.subr.mxu0 0.0
  %338 = vmatpush2.msra.mxu0 0.0
  %339 = vmatprep.subr.mxu0 0.0
  %340 = vmatpush2.msra.mxu0 0.0
  %341 = vmatprep.subr.mxu0 0.0
  %342 = vmatpush2.msra.mxu0 0.0
  %343 = vmatprep.subr.mxu0 0.0
  %344 = vmatpush2.msra.mxu0 0.0
  %345 = vmatprep.subr.mxu0 0.0
  %346 = vmatpush2.msra.mxu0 0.0
  %347 = vmatprep.mubr.f32.mxu0 0.0
  %348 = vmatmul.mubr.f32.gmra.mxu0 %v278
  %v349 = vpop.f32.mrf.mxu0
  %v350 = vadd.f32 %v270, %v349
  %v351 = vpop.f32.mrf.mxu0
  %352 = vmatprep.mubr.f32.mxu0 0.0
  %353 = vmatmul.mubr.f32.gmra.mxu0 %v281
  %v354 = vpop.f32.mrf.mxu0
  %v355 = vadd.f32 %v275, %v354
  %v356 = vpop.f32.mrf.mxu0
  %357 = vdwg.mxu0
  %v358 = vtanh.pop %v350
  %v359 = vtanh.pop %v355
  %360 = vst [vmem:[%s9] sm:$0xff] %v358
  %361 = vst [vmem:[%s9 + $0x8] sm:$0xff] %v359
  // Predicated region
  $region30: #{generator_forward.1} parent=0 // pred_check
    _
  $region31: #{generator_forward.1} parent=0 // pred_check_branch
    %363 = sbr.rel (0) target = $region33
  $region32: #{generator_forward.1} parent=0 // pred_region
    _
  $region33: #{generator_forward.1} parent=0 // pred_fallthru
    _
  // Predicated region
  $region34: #{generator_forward.1} parent=0 // pred_check
    _
  $region35: #{generator_forward.1} parent=0 // pred_check_branch
    %365 = sbr.rel (0) target = $region37
  $region36: #{generator_forward.1} parent=0 // pred_region
    _
  $region37: #{generator_forward.1} parent=0 // pred_fallthru
    _
  // Predicated region
  $region38: #{generator_forward.1} parent=0 // pred_check
    _
  $region39: #{generator_forward.1} parent=0 // pred_check_branch
    %367 = sbr.rel (0) target = $region41
  $region40: #{generator_forward.1} parent=0 // pred_region
    _
  $region41: #{generator_forward.1} parent=0 // pred_fallthru
    _
  // Predicated region
  $region42: #{generator_forward.1} parent=0 // pred_check
    _
  $region43: #{generator_forward.1} parent=0 // pred_check_branch
    %369 = sbr.rel (0) target = $region45
  $region44: #{generator_forward.1} parent=0 // pred_region
    _
  $region45: #{generator_forward.1} parent=0 // pred_fallthru
    _
  // Predicated region
  $region46: #{generator_forward.1} parent=0 // pred_check
    _
  $region47: #{generator_forward.1} parent=0 // pred_check_branch
    %371 = sbr.rel (0) target = $region49
  $region48: #{generator_forward.1} parent=0 // pred_region
    _
  $region49: #{generator_forward.1} parent=0 // pred_fallthru
    _
  // Predicated region
  $region50: #{generator_forward.1} parent=0 // pred_check
    _
  $region51: #{generator_forward.1} parent=0 // pred_check_branch
    %373 = sbr.rel (0) target = $region53
  $region52: #{generator_forward.1} parent=0 // pred_region
    _
  $region53: #{generator_forward.1} parent=0 // pred_fallthru
    _

</llo_original>
